<compile_context>
chip_gen: v7x
topology: tpu7x:2x2x1
jax: 0.10.0
libtpu: 0.0.40
codegen_flags: <defaults>
</compile_context>

<pallas_src>
import functools

import jax
import jax.numpy as jnp
import numpy as np
from jax.experimental import pallas as pl
from jax.experimental.pallas import tpu as pltpu

INF = 1.0e12                            # matches the module default inf=1e12
_TARGET_BLOCK_BYTES = 6 * 1024 * 1024   # combined logits+labels bytes per block
_VMEM_LIMIT_BYTES = 48 * 1024 * 1024    # safe on v5e/v6e (128 MiB) and v7x (64 MiB)


def _circle_loss_kernel(logits_ref, labels_ref, out_ref,
                        m_neg, s_neg, m_pos, s_pos,
                        *, n_rows, n_cols, tile_b, tile_n,
                        mask_rows, mask_cols):
    """Online two-branch logsumexp over class chunks, one exp per element."""
    bi = pl.program_id(0)
    ni = pl.program_id(1)

    @pl.when(ni == 0)
    def _init():
        # The reference concatenates a zero column: exp(0)=1 seeds each branch.
        m_neg[...] = jnp.zeros_like(m_neg)
        m_pos[...] = jnp.zeros_like(m_pos)
        s_neg[...] = jnp.ones_like(s_neg)
        s_pos[...] = jnp.ones_like(s_pos)

    logits = logits_ref[...].astype(jnp.float32)            # (tile_b, tile_n)
    pos = labels_ref[...] != 0                               # binary labels assumed
    x = jnp.where(pos, -logits, logits)                      # == (1 - 2*labels)*logits

    if mask_cols:   # ragged class tile: exclude padded / OOB columns
        col = (jax.lax.broadcasted_iota(jnp.int32, (tile_b, tile_n), 1)
               + ni * tile_n)
        valid = col < n_cols
        pos_sel = jnp.logical_and(pos, valid)
        neg_sel = jnp.logical_and(jnp.logical_not(pos), valid)
        neg_x = jnp.where(neg_sel, x, -INF)
        pos_x = jnp.where(pos_sel, x, -INF)
    else:
        pos_sel = pos
        neg_x = jnp.where(pos, -INF, x)
        pos_x = jnp.where(pos, x, -INF)

    m_neg_new = jnp.maximum(m_neg[...], jnp.max(neg_x, axis=-1, keepdims=True))
    m_pos_new = jnp.maximum(m_pos[...], jnp.max(pos_x, axis=-1, keepdims=True))

    # Single EUP exp per element; each element is scaled by its own branch max.
    e = jnp.exp(x - jnp.where(pos_sel, m_pos_new, m_neg_new))
    if mask_cols:
        sum_neg = jnp.sum(jnp.where(neg_sel, e, 0.0), axis=-1, keepdims=True)
        sum_pos = jnp.sum(jnp.where(pos_sel, e, 0.0), axis=-1, keepdims=True)
    else:
        sum_neg = jnp.sum(jnp.where(pos, 0.0, e), axis=-1, keepdims=True)
        sum_pos = jnp.sum(jnp.where(pos, e, 0.0), axis=-1, keepdims=True)

    s_neg[...] = s_neg[...] * jnp.exp(m_neg[...] - m_neg_new) + sum_neg
    s_pos[...] = s_pos[...] * jnp.exp(m_pos[...] - m_pos_new) + sum_pos
    m_neg[...] = m_neg_new
    m_pos[...] = m_pos_new

    @pl.when(ni == pl.num_programs(1) - 1)
    def _finalize():
        per_row = (m_neg[...] + jnp.log(s_neg[...]) +
                   m_pos[...] + jnp.log(s_pos[...]))         # (tile_b, 1)
        if mask_rows:   # ragged batch tile: zero rows past the real batch
            row = (jax.lax.broadcasted_iota(jnp.int32, (tile_b, 1), 0)
                   + bi * tile_b)
            per_row = jnp.where(row < n_rows, per_row, 0.0)
        out_ref[...] = per_row


def _sublane_align(dtype):
    # f32 -> 8 sublanes, bf16 -> 16, int8/bool -> 32 (packed-dtype tiling).
    return max(8, 32 // jnp.dtype(dtype).itemsize)


def _choose_tiles(B, N, bytes_per_elem, align_b, tile_b, tile_n):
    # --- class (lane) tile -------------------------------------------------
    if tile_n is None:
        if N <= 128 or align_b * N * bytes_per_elem <= _TARGET_BLOCK_BYTES:
            tile_n = N                                    # full row fits the budget
        else:                                             # extreme-multilabel N: tile it
            tile_n = max(128,
                         (_TARGET_BLOCK_BYTES // (align_b * bytes_per_elem))
                         // 128 * 128)
    else:
        tile_n = min(int(tile_n), N)
        if tile_n < N and tile_n % 128 != 0:
            raise ValueError("tile_n must be a multiple of 128 (or >= N)")

    # --- batch (sublane) tile ----------------------------------------------
    block_row_bytes = tile_n * bytes_per_elem
    max_rows = max(align_b,
                   (_TARGET_BLOCK_BYTES // block_row_bytes) // align_b * align_b)
    if tile_b is None:
        max_tiles = pl.cdiv(B, align_b)                   # most tiles B can supply
        grid_b = max(pl.cdiv(B, max_rows),                # fewest tiles VMEM allows
                     min(4, max_tiles))                   # >= ~4 steps for pipelining
        if grid_b % 2 == 1 and grid_b < max_tiles:
            grid_b += 1                                   # even grid for v7x megacore
        tile_b = pl.cdiv(pl.cdiv(B, grid_b), align_b) * align_b
    else:
        tile_b = max(align_b, (int(tile_b) // align_b) * align_b)  # round DOWN
    return int(tile_b), int(tile_n)


def multi_label_circle_loss(logits, labels, *, reduction="mean",
                            tile_b=None, tile_n=None):
    """Pallas TPU implementation of MultiLabelCircleLoss.forward.

    Matches the PyTorch module: 'mean' -> mean over rows; any other reduction
    (incl. 'none') falls through to sum, as in the module.  Labels must be
    binary (0/1) but may be any dtype (int8/bool halves the label HBM traffic);
    logits may be f32 or bf16 (cast to f32 in-kernel).
    """
    # TODO(synk): continuous "soft" labels of the PyTorch formula are not
    # supported; labels are binarized with `labels != 0`.
    assert logits.ndim == 2 and logits.shape == labels.shape
    B, N = logits.shape
    bpe = jnp.dtype(logits.dtype).itemsize + jnp.dtype(labels.dtype).itemsize
    align_b = max(_sublane_align(logits.dtype), _sublane_align(labels.dtype))
    tile_b, tile_n = _choose_tiles(B, N, bpe, align_b, tile_b, tile_n)

    grid_b = pl.cdiv(B, tile_b)
    grid_n = pl.cdiv(N, tile_n)
    kernel = functools.partial(
        _circle_loss_kernel,
        n_rows=B, n_cols=N, tile_b=tile_b, tile_n=tile_n,
        mask_rows=(B % tile_b != 0), mask_cols=(N % tile_n != 0))

    per_row = pl.pallas_call(
        kernel,
        out_shape=jax.ShapeDtypeStruct((grid_b * tile_b, 1), jnp.float32),
        grid_spec=pltpu.PrefetchScalarGridSpec(
            num_scalar_prefetch=0,
            grid=(grid_b, grid_n),
            in_specs=[
                pl.BlockSpec((tile_b, tile_n), lambda bi, ni: (bi, ni)),
                pl.BlockSpec((tile_b, tile_n), lambda bi, ni: (bi, ni)),
            ],
            out_specs=pl.BlockSpec((tile_b, 1), lambda bi, ni: (bi, 0)),
            scratch_shapes=[pltpu.VMEM((tile_b, 1), jnp.float32)] * 4,
        ),
        compiler_params=pltpu.CompilerParams(
            dimension_semantics=("parallel", "arbitrary"),
            vmem_limit_bytes=_VMEM_LIMIT_BYTES,
        ),
    )(logits, labels)

    total = jnp.sum(per_row)        # masked (padded) rows contribute exactly 0
    if reduction == "mean":
        return total / jnp.float32(B)
    return total                     # PyTorch module: every non-'mean' -> sum


def _reference(logits, labels, reduction="mean"):
    # Direct translation of the PyTorch forward (with the explicit concat).
    logits = logits.astype(jnp.float32)
    labels = labels.astype(jnp.float32)
    x = (1.0 - 2.0 * labels) * logits
    x_neg = x - labels * INF
    x_pos = x - (1.0 - labels) * INF
    zeros = jnp.zeros_like(x[..., :1])
    x_neg = jnp.concatenate([x_neg, zeros], axis=-1)
    x_pos = jnp.concatenate([x_pos, zeros], axis=-1)
    loss = (jax.scipy.special.logsumexp(x_neg, axis=-1) +
            jax.scipy.special.logsumexp(x_pos, axis=-1))
    return jnp.mean(loss) if reduction == "mean" else jnp.sum(loss)


if __name__ == "__main__":
    key = jax.random.PRNGKey(0)
    k1, k2, k3, k4, k5, k6 = jax.random.split(key, 6)

    def check(loss, ref):
        np.testing.assert_allclose(np.asarray(loss), np.asarray(ref),
                                   rtol=2e-5, atol=1e-4)

    # Case 0: the docstring example from the PyTorch module (N=4).
    labels0 = jnp.array([[1, 1, 1, 1], [0, 0, 0, 1]], dtype=jnp.float32)
    logits0 = jnp.array([[0, 1, 1, 0], [1, 0, 0, 1]], dtype=jnp.float32)
    loss0 = jax.block_until_ready(multi_label_circle_loss(logits0, labels0))
    check(loss0, _reference(logits0, labels0, "mean"))

    # Case 1: ragged batch, int8 labels, mean reduction, auto tiling.
    B1, N1 = 14, 128
    logits1 = jax.random.normal(k1, (B1, N1), dtype=jnp.float32) * 3.0
    labels1 = (jax.random.uniform(k2, (B1, N1)) < 0.25).astype(jnp.int8)
    loss1 = jax.block_until_ready(
        multi_label_circle_loss(logits1, labels1, reduction="mean"))
    check(loss1, _reference(logits1, labels1, "mean"))

    # Case 2: multi-step grid on both axes (online LSE path), sum reduction.
    B2, N2 = 32, 256
    logits2 = jax.random.normal(k3, (B2, N2), dtype=jnp.float32) * 2.0
    labels2 = (jax.random.uniform(k4, (B2, N2)) < 0.5).astype(jnp.float32)
    loss2 = jax.block_until_ready(
        multi_label_circle_loss(logits2, labels2, reduction="sum",
                                tile_b=8, tile_n=128))
    check(loss2, _reference(logits2, labels2, "sum"))

    # Case 3: ragged class tiles (column masking) + ragged batch, int8 labels.
    B3, N3 = 16, 384
    logits3 = jax.random.normal(k5, (B3, N3), dtype=jnp.float32) * 2.5
    labels3 = (jax.random.uniform(k6, (B3, N3)) < 0.1).astype(jnp.int8)
    loss3 = jax.block_until_ready(
        multi_label_circle_loss(logits3, labels3, reduction="mean",
                                tile_n=256))
    check(loss3, _reference(logits3, labels3, "mean"))

    print("KERNEL_OK")
</pallas_src>

<mosaic_0001>
module attributes {stable_mosaic.version = 11 : i64} {
  func.func @_circle_loss_kernel(%arg0: i32, %arg1: i32, %arg2: memref<8x4xf32, #tpu.memory_space<vmem>>, %arg3: memref<8x4xf32, #tpu.memory_space<vmem>>, %arg4: memref<8x1xf32, #tpu.memory_space<vmem>>, %arg5: memref<8x1xf32, #tpu.memory_space<vmem>>, %arg6: memref<8x1xf32, #tpu.memory_space<vmem>>, %arg7: memref<8x1xf32, #tpu.memory_space<vmem>>, %arg8: memref<8x1xf32, #tpu.memory_space<vmem>>) attributes {dimension_semantics = [#tpu.dimension_semantics<parallel>, #tpu.dimension_semantics<arbitrary>], iteration_bounds = array<i64: 1, 1>, scalar_prefetch = 0 : i64, scratch_operands = 4 : i64, tpu.core_type = #tpu.core_type<tc>, window_params = [{transform_indices = @transform_0, window_bounds = array<i64: 8, 4>}, {transform_indices = @transform_1, window_bounds = array<i64: 8, 4>}, {transform_indices = @transform_2, window_bounds = array<i64: 8, 1>}]} {
    %c0_i32 = arith.constant 0 : i32
    %0 = arith.cmpi eq, %arg1, %c0_i32 : i32
    %1 = arith.extui %0 : i1 to i32
    %c0_i32_0 = arith.constant 0 : i32
    %2 = arith.cmpi ne, %1, %c0_i32_0 : i32
    scf.if %2 {
      %cst_35 = arith.constant 0.000000e+00 : f32
      %56 = vector.broadcast %cst_35 : f32 to vector<8x1xf32>
      %c0_36 = arith.constant 0 : index
      %c0_37 = arith.constant 0 : index
      %57 = vector.load %arg5[%c0_36, %c0_37] : memref<8x1xf32, #tpu.memory_space<vmem>>, vector<8x1xf32>
      tpu.vector_store %arg5[%c0_36, %c0_37], %56 {strides = array<i32>} : memref<8x1xf32, #tpu.memory_space<vmem>>, vector<8x1xf32>,
      %cst_38 = arith.constant 0.000000e+00 : f32
      %58 = vector.broadcast %cst_38 : f32 to vector<8x1xf32>
      %c0_39 = arith.constant 0 : index
      %c0_40 = arith.constant 0 : index
      %59 = vector.load %arg7[%c0_39, %c0_40] : memref<8x1xf32, #tpu.memory_space<vmem>>, vector<8x1xf32>
      tpu.vector_store %arg7[%c0_39, %c0_40], %58 {strides = array<i32>} : memref<8x1xf32, #tpu.memory_space<vmem>>, vector<8x1xf32>,
      %cst_41 = arith.constant 1.000000e+00 : f32
      %60 = vector.broadcast %cst_41 : f32 to vector<8x1xf32>
      %c0_42 = arith.constant 0 : index
      %c0_43 = arith.constant 0 : index
      %61 = vector.load %arg6[%c0_42, %c0_43] : memref<8x1xf32, #tpu.memory_space<vmem>>, vector<8x1xf32>
      tpu.vector_store %arg6[%c0_42, %c0_43], %60 {strides = array<i32>} : memref<8x1xf32, #tpu.memory_space<vmem>>, vector<8x1xf32>,
      %cst_44 = arith.constant 1.000000e+00 : f32
      %62 = vector.broadcast %cst_44 : f32 to vector<8x1xf32>
      %c0_45 = arith.constant 0 : index
      %c0_46 = arith.constant 0 : index
      %63 = vector.load %arg8[%c0_45, %c0_46] : memref<8x1xf32, #tpu.memory_space<vmem>>, vector<8x1xf32>
      tpu.vector_store %arg8[%c0_45, %c0_46], %62 {strides = array<i32>} : memref<8x1xf32, #tpu.memory_space<vmem>>, vector<8x1xf32>,
    } else {
    }
    %c0 = arith.constant 0 : index
    %c0_1 = arith.constant 0 : index
    %3 = vector.load %arg2[%c0, %c0_1] : memref<8x4xf32, #tpu.memory_space<vmem>>, vector<8x4xf32>
    %c0_2 = arith.constant 0 : index
    %c0_3 = arith.constant 0 : index
    %4 = vector.load %arg3[%c0_2, %c0_3] : memref<8x4xf32, #tpu.memory_space<vmem>>, vector<8x4xf32>
    %cst = arith.constant 0.000000e+00 : f32
    %5 = vector.broadcast %cst : f32 to vector<8x4xf32>
    %6 = arith.cmpf one, %4, %5 : vector<8x4xf32>
    %cst_4 = arith.constant 0.000000e+00 : f32
    %7 = vector.broadcast %cst_4 : f32 to vector<8x4xf32>
    %8 = arith.subf %7, %3 : vector<8x4xf32>
    %9 = arith.select %6, %8, %3 : vector<8x4xi1>, vector<8x4xf32>
    %cst_5 = arith.constant -9.99999995E+11 : f32
    %10 = vector.broadcast %cst_5 : f32 to vector<8x4xf32>
    %11 = arith.select %6, %10, %9 : vector<8x4xi1>, vector<8x4xf32>
    %cst_6 = arith.constant -9.99999995E+11 : f32
    %12 = vector.broadcast %cst_6 : f32 to vector<8x4xf32>
    %13 = arith.select %6, %9, %12 : vector<8x4xi1>, vector<8x4xf32>
    %c0_7 = arith.constant 0 : index
    %c0_8 = arith.constant 0 : index
    %14 = vector.load %arg5[%c0_7, %c0_8] : memref<8x1xf32, #tpu.memory_space<vmem>>, vector<8x1xf32>
    %cst_9 = arith.constant dense<0xFF800000> : vector<8xf32>
    %15 = vector.multi_reduction <maximumf>, %11, %cst_9 [1] : vector<8x4xf32> to vector<8xf32>
    %16 = vector.shape_cast %15 : vector<8xf32> to vector<8x1xf32>
    %17 = arith.maximumf %14, %16 : vector<8x1xf32>
    %c0_10 = arith.constant 0 : index
    %c0_11 = arith.constant 0 : index
    %18 = vector.load %arg7[%c0_10, %c0_11] : memref<8x1xf32, #tpu.memory_space<vmem>>, vector<8x1xf32>
    %cst_12 = arith.constant dense<0xFF800000> : vector<8xf32>
    %19 = vector.multi_reduction <maximumf>, %13, %cst_12 [1] : vector<8x4xf32> to vector<8xf32>
    %20 = vector.shape_cast %19 : vector<8xf32> to vector<8x1xf32>
    %21 = arith.maximumf %18, %20 : vector<8x1xf32>
    %22 = vector.shape_cast %21 : vector<8x1xf32> to vector<8x1xf32>
    %23 = vector.broadcast %22 : vector<8x1xf32> to vector<8x4xf32>
    %24 = vector.shape_cast %17 : vector<8x1xf32> to vector<8x1xf32>
    %25 = vector.broadcast %24 : vector<8x1xf32> to vector<8x4xf32>
    %26 = arith.select %6, %23, %25 : vector<8x4xi1>, vector<8x4xf32>
    %27 = arith.subf %9, %26 : vector<8x4xf32>
    %28 = math.exp %27 : vector<8x4xf32>
    %cst_13 = arith.constant 0.000000e+00 : f32
    %29 = vector.broadcast %cst_13 : f32 to vector<8x4xf32>
    %30 = arith.select %6, %29, %28 : vector<8x4xi1>, vector<8x4xf32>
    %cst_14 = arith.constant dense<0.000000e+00> : vector<8xf32>
    %31 = vector.multi_reduction <add>, %30, %cst_14 [1] : vector<8x4xf32> to vector<8xf32>
    %32 = vector.shape_cast %31 : vector<8xf32> to vector<8x1xf32>
    %cst_15 = arith.constant 0.000000e+00 : f32
    %33 = vector.broadcast %cst_15 : f32 to vector<8x4xf32>
    %34 = arith.select %6, %28, %33 : vector<8x4xi1>, vector<8x4xf32>
    %cst_16 = arith.constant dense<0.000000e+00> : vector<8xf32>
    %35 = vector.multi_reduction <add>, %34, %cst_16 [1] : vector<8x4xf32> to vector<8xf32>
    %36 = vector.shape_cast %35 : vector<8xf32> to vector<8x1xf32>
    %c0_17 = arith.constant 0 : index
    %c0_18 = arith.constant 0 : index
    %37 = vector.load %arg6[%c0_17, %c0_18] : memref<8x1xf32, #tpu.memory_space<vmem>>, vector<8x1xf32>
    %c0_19 = arith.constant 0 : index
    %c0_20 = arith.constant 0 : index
    %38 = vector.load %arg5[%c0_19, %c0_20] : memref<8x1xf32, #tpu.memory_space<vmem>>, vector<8x1xf32>
    %39 = arith.subf %38, %17 : vector<8x1xf32>
    %40 = math.exp %39 : vector<8x1xf32>
    %41 = arith.mulf %37, %40 : vector<8x1xf32>
    %42 = arith.addf %41, %32 : vector<8x1xf32>
    %c0_21 = arith.constant 0 : index
    %c0_22 = arith.constant 0 : index
    %43 = vector.load %arg6[%c0_21, %c0_22] : memref<8x1xf32, #tpu.memory_space<vmem>>, vector<8x1xf32>
    tpu.vector_store %arg6[%c0_21, %c0_22], %42 {strides = array<i32>} : memref<8x1xf32, #tpu.memory_space<vmem>>, vector<8x1xf32>,
    %c0_23 = arith.constant 0 : index
    %c0_24 = arith.constant 0 : index
    %44 = vector.load %arg8[%c0_23, %c0_24] : memref<8x1xf32, #tpu.memory_space<vmem>>, vector<8x1xf32>
    %c0_25 = arith.constant 0 : index
    %c0_26 = arith.constant 0 : index
    %45 = vector.load %arg7[%c0_25, %c0_26] : memref<8x1xf32, #tpu.memory_space<vmem>>, vector<8x1xf32>
    %46 = arith.subf %45, %21 : vector<8x1xf32>
    %47 = math.exp %46 : vector<8x1xf32>
    %48 = arith.mulf %44, %47 : vector<8x1xf32>
    %49 = arith.addf %48, %36 : vector<8x1xf32>
    %c0_27 = arith.constant 0 : index
    %c0_28 = arith.constant 0 : index
    %50 = vector.load %arg8[%c0_27, %c0_28] : memref<8x1xf32, #tpu.memory_space<vmem>>, vector<8x1xf32>
    tpu.vector_store %arg8[%c0_27, %c0_28], %49 {strides = array<i32>} : memref<8x1xf32, #tpu.memory_space<vmem>>, vector<8x1xf32>,
    %c0_29 = arith.constant 0 : index
    %c0_30 = arith.constant 0 : index
    %51 = vector.load %arg5[%c0_29, %c0_30] : memref<8x1xf32, #tpu.memory_space<vmem>>, vector<8x1xf32>
    tpu.vector_store %arg5[%c0_29, %c0_30], %17 {strides = array<i32>} : memref<8x1xf32, #tpu.memory_space<vmem>>, vector<8x1xf32>,
    %c0_31 = arith.constant 0 : index
    %c0_32 = arith.constant 0 : index
    %52 = vector.load %arg7[%c0_31, %c0_32] : memref<8x1xf32, #tpu.memory_space<vmem>>, vector<8x1xf32>
    tpu.vector_store %arg7[%c0_31, %c0_32], %21 {strides = array<i32>} : memref<8x1xf32, #tpu.memory_space<vmem>>, vector<8x1xf32>,
    %c0_i32_33 = arith.constant 0 : i32
    %53 = arith.cmpi eq, %arg1, %c0_i32_33 : i32
    %54 = arith.extui %53 : i1 to i32
    %c0_i32_34 = arith.constant 0 : i32
    %55 = arith.cmpi ne, %54, %c0_i32_34 : i32
    scf.if %55 {
      %c0_35 = arith.constant 0 : index
      %c0_36 = arith.constant 0 : index
      %56 = vector.load %arg5[%c0_35, %c0_36] : memref<8x1xf32, #tpu.memory_space<vmem>>, vector<8x1xf32>
      %c0_37 = arith.constant 0 : index
      %c0_38 = arith.constant 0 : index
      %57 = vector.load %arg6[%c0_37, %c0_38] : memref<8x1xf32, #tpu.memory_space<vmem>>, vector<8x1xf32>
      %58 = math.log %57 : vector<8x1xf32>
      %59 = arith.addf %56, %58 : vector<8x1xf32>
      %c0_39 = arith.constant 0 : index
      %c0_40 = arith.constant 0 : index
      %60 = vector.load %arg7[%c0_39, %c0_40] : memref<8x1xf32, #tpu.memory_space<vmem>>, vector<8x1xf32>
      %61 = arith.addf %59, %60 : vector<8x1xf32>
      %c0_41 = arith.constant 0 : index
      %c0_42 = arith.constant 0 : index
      %62 = vector.load %arg8[%c0_41, %c0_42] : memref<8x1xf32, #tpu.memory_space<vmem>>, vector<8x1xf32>
      %63 = math.log %62 : vector<8x1xf32>
      %64 = arith.addf %61, %63 : vector<8x1xf32>
      %65 = tpu.iota {dimensions = array<i32: 0>} : vector<8x1xi32>
      %c8_i32 = arith.constant 8 : i32
      %66 = arith.muli %arg0, %c8_i32 : i32
      %67 = vector.broadcast %66 : i32 to vector<8x1xi32>
      %68 = arith.addi %65, %67 : vector<8x1xi32>
      %c2_i32 = arith.constant 2 : i32
      %69 = vector.broadcast %c2_i32 : i32 to vector<8x1xi32>
      %70 = arith.cmpi slt, %68, %69 : vector<8x1xi32>
      %cst_43 = arith.constant 0.000000e+00 : f32
      %71 = vector.broadcast %cst_43 : f32 to vector<8x1xf32>
      %72 = arith.select %70, %64, %71 : vector<8x1xi1>, vector<8x1xf32>
      %c0_44 = arith.constant 0 : index
      %c0_45 = arith.constant 0 : index
      %73 = vector.load %arg4[%c0_44, %c0_45] : memref<8x1xf32, #tpu.memory_space<vmem>>, vector<8x1xf32>
      tpu.vector_store %arg4[%c0_44, %c0_45], %72 {strides = array<i32>} : memref<8x1xf32, #tpu.memory_space<vmem>>, vector<8x1xf32>,
    } else {
    }
    return
  }
  func.func @transform_0(%arg0: i32, %arg1: i32) -> (i32, i32) {
    %c0_i32 = arith.constant 0 : i32
    return %arg0, %arg1 : i32, i32
  }
  func.func @transform_1(%arg0: i32, %arg1: i32) -> (i32, i32) {
    %c0_i32 = arith.constant 0 : i32
    return %arg0, %arg1 : i32, i32
  }
  func.func @transform_2(%arg0: i32, %arg1: i32) -> (i32, i32) {
    %c0_i32 = arith.constant 0 : i32
    %c0_i32_0 = arith.constant 0 : i32
    return %arg0, %c0_i32 : i32, i32
  }
}

</mosaic_0001>

<llo_original>
// kernel: tpu_custom_call.1
$region0: #{tpu_custom_call.1}
  #allocation0 [shape = 'u32[]', space=smem, size = 0x4, offset = 0x4, fixed_abs, tag = 'smem constant byte address 0x4 - core index']
  #allocation1 [shape = 'u32[144,128]{1,0:T(1,128)}', space=vmem, size = 0x12000, scoped, tag = 'internal scratch']
  #allocation2 [shape = 'f32[8,1]{1,0:T(8,128)}', space=vmem, size = 0x1000, scoped, tag = 'scratch operand']
  #allocation3 [shape = 'f32[8,1]{1,0:T(8,128)}', space=vmem, size = 0x1000, scoped, tag = 'scratch operand']
  #allocation4 [shape = 'f32[8,1]{1,0:T(8,128)}', space=vmem, size = 0x1000, scoped, tag = 'scratch operand']
  #allocation5 [shape = 'f32[8,1]{1,0:T(8,128)}', space=vmem, size = 0x1000, scoped, tag = 'scratch operand']
  %s0 = inlined_call_operand.hbm [shape: f32[2,4], index: 0, kind: input, shape index: {}]
  %s1 = inlined_call_operand.vmem [shape: f32[2,4], index: 1, kind: input, shape index: {}]
  %s2 = inlined_call_operand.vmem [shape: f32[8,1], index: 2, kind: output, shape index: {}]
  %s3 = sld [smem:[#allocation0]]
  $region30: #{tpu_custom_call.1} parent=0
    _
  %s5 = ssub.s32 1, %s3
  %s6 = scalar_select 0, %s5, %s3
  $region1: #{tpu_custom_call.1} parent=0
    #allocation6 [shape = 'u8[4096]{0}', space=vmem, size = 0x1000, scoped, tag = 'input window, operand 0, single buffered']
    #allocation7 [shape = 's32[1]{0}', space=sflag, size = 0x4, scoped, tag = 'scoped memory for tpu_custom_call.1']
    %7 = vsyncpa [#allocation7], 0
    // Predicated region
    $region2: #{tpu_custom_call.1} parent=1 // pred_check
      _
    $region3: #{tpu_custom_call.1} parent=1 // pred_check_branch
      %9 = sbr.rel (0) target = $region5
    $region4: #{tpu_custom_call.1} parent=1 // pred_region
      %s11 = ssub.s32 128, 32
      %12 = vsyncadd [#allocation7], %s11
      %s13 = sshll.u32 [#allocation6], 4
      %s14 = int_to_ptr.vmem [resolvable:$true] %s13
      %19 = dma.hbm_to_vmem [thread:$0]  %s0, 32, %s14, [#allocation7], 32, 32, 2
    $region5: #{tpu_custom_call.1} parent=1 // pred_fallthru
      _
    // Predicated region
    $region6: #{tpu_custom_call.1} parent=1 // pred_check
      _
    $region7: #{tpu_custom_call.1} parent=1 // pred_check_branch
      %21 = sbr.rel (0) target = $region9
    $region8: #{tpu_custom_call.1} parent=1 // pred_region
      _
    $region9: #{tpu_custom_call.1} parent=1 // pred_fallthru
      _
    // Predicated region
    $region10: #{tpu_custom_call.1} parent=1 // pred_check
      _
    $region11: #{tpu_custom_call.1} parent=1 // pred_check_branch
      %23 = sbr.rel (0) target = $region13
    $region12: #{tpu_custom_call.1} parent=1 // pred_region
      %24 = dma.done [#allocation7], 128
    $region13: #{tpu_custom_call.1} parent=1 // pred_fallthru
      _
    %p25 = scmp.eq.s32.totalorder 0, 0
    // Predicated region
    $region14: #{tpu_custom_call.1} parent=1 // pred_check
      %p26 = pneg %p25
    $region15: #{tpu_custom_call.1} parent=1 // pred_check_branch
      %28 = sbr.rel (%p26) target = $region17
    $region16: #{tpu_custom_call.1} parent=1 // pred_region
      %vm29 = vcmask 7168
      %30 = vst.msk [vmem:[#allocation2] sm:$0xff] %vm29, 0.0
      %31 = vst.msk [vmem:[#allocation4] sm:$0xff] %vm29, 0.0
      %32 = vst.msk [vmem:[#allocation3] sm:$0xff] %vm29, 1.0
      %33 = vst.msk [vmem:[#allocation5] sm:$0xff] %vm29, 1.0
    $region17: #{tpu_custom_call.1} parent=1 // pred_fallthru
      _
    %v34 = vld [vmem:[#allocation6] sm:$0xff]
    %v35 = vld [vmem:[%s1] sm:$0xff]
    %vm36 = vcmp.ne.f32.partialorder %v35, 0.0
    %v37 = vsub.f32 0.0, %v34
    %v38 = vsel %vm36, %v37, %v34
    %v39 = vsel %vm36, -1e+12, %v34
    %v40 = vsel %vm36, %v37, -1e+12
    %v41 = vld [vmem:[#allocation2] sm:$0xff]
    %vm42 = vcmask 31744
    %v43 = vsel %vm42, %v39, -inf
    %44 = vmax.xlane.f32.xlu0 %v43
    %v45 = vpop.xlane.xlu0 %44
    %v46 = vmax.f32 %v41, %v45
    %v47 = vld [vmem:[#allocation4] sm:$0xff]
    %v48 = vsel %vm42, %v40, -inf
    %49 = vmax.xlane.f32.xlu0 %v48
    %v50 = vpop.xlane.xlu0 %49
    %v51 = vmax.f32 %v47, %v50
    %53 = vset.pattern.permute.xlu0 0
    %54 = vperm.xlu0 %53, %v51
    %v55 = vpop.permute.xlu0 %54
    %58 = vset.pattern.permute.xlu0 0
    %59 = vperm.xlu0 %58, %v46
    %v60 = vpop.permute.xlu0 %59
    %v62 = vsel %vm36, %v55, %v60
    %v63 = vsub.f32 %v38, %v62
    %v64 = vmul.f32 %v63, 1.442695
    %v65 = vpow.pop %v64
    %v66 = vsel %vm36, 0.0, %v65
    %v67 = vsel %vm42, %v66, 0.0
    %68 = vadd.xlane.f32.xlu0 %v67
    %v69 = vpop.xlane.xlu0 %68
    %v70 = vsel %vm36, %v65, 0.0
    %v71 = vsel %vm42, %v70, 0.0
    %72 = vadd.xlane.f32.xlu0 %v71
    %v73 = vpop.xlane.xlu0 %72
    %v74 = vld [vmem:[#allocation3] sm:$0xff]
    %v75 = vsub.f32 %v41, %v46
    %v76 = vmul.f32 %v75, 1.442695
    %v77 = vpow.pop %v76
    %v78 = vmul.f32 %v74, %v77
    %v79 = vadd.f32 %v78, %v69
    %vm80 = vcmask 7168
    %81 = vst.msk [vmem:[#allocation3] sm:$0xff] %vm80, %v79
    %v82 = vld [vmem:[#allocation5] sm:$0xff]
    %v83 = vld [vmem:[#allocation4] sm:$0xff]
    %v84 = vsub.f32 %v83, %v51
    %v85 = vmul.f32 %v84, 1.442695
    %v86 = vpow.pop %v85
    %v87 = vmul.f32 %v82, %v86
    %v88 = vadd.f32 %v87, %v73
    %89 = vst.msk [vmem:[#allocation5] sm:$0xff] %vm80, %v88
    %90 = vst.msk [vmem:[#allocation2] sm:$0xff] %vm80, %v46
    %91 = vst.msk [vmem:[#allocation4] sm:$0xff] %vm80, %v51
    // Predicated region
    $region18: #{tpu_custom_call.1} parent=1 // pred_check
      %p92 = pneg %p25
    $region19: #{tpu_custom_call.1} parent=1 // pred_check_branch
      %94 = sbr.rel (%p92) target = $region21
    $region20: #{tpu_custom_call.1} parent=1 // pred_region
      %v95 = vld [vmem:[#allocation2] sm:$0xff]
      %v96 = vld [vmem:[#allocation3] sm:$0xff]
      %v97 = vlog2.pop %v96
      %v98 = vmul.f32 %v97, 0.6931472
      %v99 = vadd.f32 %v95, %v98
      %v100 = vld [vmem:[#allocation4] sm:$0xff]
      %v101 = vadd.f32 %v99, %v100
      %v102 = vld [vmem:[#allocation5] sm:$0xff]
      %v103 = vlog2.pop %v102
      %v104 = vmul.f32 %v103, 0.6931472
      %v105 = vadd.f32 %v101, %v104
      %v106 = vlaneseq
      %v107 = vshrl.u32 %v106, 7
      %s108 = smul.u32 0, 8
      %v109 = vstv %s108
      %v110 = vadd.s32 %v107, %v109
      %vm111 = vcmp.lt.s32.totalorder %v110, 2
      %v112 = vsel %vm111, %v105, 0.0
      %113 = vst.msk [vmem:[%s2] sm:$0xff] %vm80, %v112
    $region21: #{tpu_custom_call.1} parent=1 // pred_fallthru
      _
    // Predicated region
    $region22: #{tpu_custom_call.1} parent=1 // pred_check
      _
    $region23: #{tpu_custom_call.1} parent=1 // pred_check_branch
      %115 = sbr.rel (0) target = $region25
    $region24: #{tpu_custom_call.1} parent=1 // pred_region
      _
    $region25: #{tpu_custom_call.1} parent=1 // pred_fallthru
      _
    // Predicated region
    $region26: #{tpu_custom_call.1} parent=1 // pred_check
      _
    $region27: #{tpu_custom_call.1} parent=1 // pred_check_branch
      %117 = sbr.rel (0) target = $region29
    $region28: #{tpu_custom_call.1} parent=1 // pred_region
      _
    $region29: #{tpu_custom_call.1} parent=1 // pred_fallthru
      _
    %118 = vsyncpa [#allocation7], 1

</llo_original>
